<compile_context>
chip_gen: v5e
topology: v5e:2x2
jax: 0.10.0
libtpu: 0.0.40
codegen_flags: <defaults>
</compile_context>

<pallas_src>
import functools

import jax
import jax.numpy as jnp
from jax import lax
from jax.experimental import pallas as pl
from jax.experimental.pallas import tpu as pltpu


def _contrastive_loss_kernel(lhs_ref, rhs_ref, lab_col_ref, lab_row_ref, loss_ref, *,
                             block_m, n_pad, n_valid):
    """One grid step: loss-sum for rows [i*block_m, (i+1)*block_m).

    lhs_ref     : (block_m, D)   L2-normalized embed_data rows, pre-scaled by 1/T
    rhs_ref     : (D, 2*n_pad)   [normalized embed_data | normalized embed_label]^T (resident)
    lab_col_ref : (block_m, 1)   int32 labels of the block rows
    lab_row_ref : (1, 2*n_pad)   int32 labels of all columns (tiled twice)
    loss_ref    : (8, 128)       per-block loss sum broadcast into one lane-dense tile
    """
    i = pl.program_id(0)
    start = pl.multiple_of(i * block_m, block_m)
    two_n = 2 * n_pad

    # Single MXU dot: (block_m, D) @ (D, 2*n_pad); logits already scaled by 1/T.
    s = jnp.dot(lhs_ref[...], rhs_ref[...], preferred_element_type=jnp.float32)

    # Masks: left half = f2f (diagonal removed), right half = e2p; pad columns removed.
    col2 = lax.broadcasted_iota(jnp.int32, (block_m, two_n), 1)
    in_left = col2 < n_pad
    col = jnp.where(in_left, col2, col2 - n_pad)
    row_g = start + lax.broadcasted_iota(jnp.int32, (block_m, two_n), 0)
    valid = (col < n_valid) & (jnp.logical_not(in_left) | (row_g != col))

    pos = lab_col_ref[...] == lab_row_ref[...]            # (block_m, 2*n_pad) bool

    # Per-branch maxes (matches the torch forward), single exp, fused reductions.
    m = jnp.where(valid, s, jnp.float32(-jnp.inf))        # masked, already /T
    ff_max = jnp.max(m[:, :n_pad], axis=1, keepdims=True)
    ep_max = jnp.max(m[:, n_pad:], axis=1, keepdims=True)
    e = jnp.exp(m - jnp.where(in_left, ff_max, ep_max))   # exp(-inf) == 0 at masked positions

    num = jnp.sum(jnp.where(pos, e, jnp.float32(0.0)), axis=1, keepdims=True)
    den = jnp.sum(e, axis=1, keepdims=True)
    per_row = -jnp.log(num / den)                         # (block_m, 1)

    # Mask padded rows, reduce to one scalar per block, emit as a dense (8,128) tile.
    row_ok = (start + lax.broadcasted_iota(jnp.int32, (block_m, 1), 0)) < n_valid
    block_sum = jnp.sum(jnp.where(row_ok, per_row, jnp.float32(0.0)), axis=0, keepdims=True)
    loss_ref[...] = jnp.broadcast_to(block_sum, (8, 128))


def _round_up(a, b):
    return ((a + b - 1) // b) * b


def exhaustive_contrastive_loss(embed_data, embed_label, label, *, num_classes, temperature):
    """Pallas version of ExhustiveContrastiveLoss.forward.

    num_classes only shapes the intermediate one-hot mask in the torch code; after the
    `mask[label]` gather it collapses to a label-equality test, done directly in-kernel.
    """
    del num_classes
    n, d = embed_data.shape
    eps = 1e-8
    op_dtype = embed_data.dtype
    itemsize = jnp.dtype(op_dtype).itemsize

    # ---- hoisted (single pass) L2 normalization; fold 1/temperature into the LHS ----------
    x32 = embed_data.astype(jnp.float32)
    y32 = embed_label.astype(jnp.float32)
    xn = x32 * lax.rsqrt(jnp.maximum(jnp.sum(x32 * x32, axis=-1, keepdims=True), eps * eps))
    yn = y32 * lax.rsqrt(jnp.maximum(jnp.sum(y32 * y32, axis=-1, keepdims=True), eps * eps))
    inv_t = jnp.float32(1.0 / float(temperature))

    # ---- tiling: block_m rows per grid step; columns padded to a lane (128) multiple ------
    n128 = _round_up(n, 128)
    block_m, n_pad = 128, n128
    for cand in (512, 256, 128):
        bm = min(cand, n128)
        npad = _round_up(n, bm)
        est = 6 * bm * 2 * npad * 4 + 2 * d * 2 * npad * itemsize + 2 * bm * d * itemsize
        if est <= 40 * 1024 * 1024 or cand == 128:
            block_m, n_pad = bm, npad
            break
    num_blocks = n_pad // block_m

    # ---- pad, pre-scale LHS, pre-transpose + concatenate the RHS once ---------------------
    lab = label.astype(jnp.int32)
    if n_pad != n:
        pad = n_pad - n
        xn = jnp.pad(xn, ((0, pad), (0, 0)))
        yn = jnp.pad(yn, ((0, pad), (0, 0)))
        lab = jnp.concatenate([lab, jnp.full((pad,), -1, jnp.int32)])
    lhs = (xn * inv_t).astype(op_dtype)                           # (n_pad, d)
    rhs = jnp.concatenate([xn.T, yn.T], axis=1).astype(op_dtype)  # (d, 2*n_pad)
    lab_col = lab.reshape(n_pad, 1)
    lab_row = jnp.concatenate([lab, lab]).reshape(1, 2 * n_pad)

    est = (6 * block_m * 2 * n_pad * 4                 # f32 (block_m, 2*n_pad) temporaries
           + 2 * d * 2 * n_pad * itemsize              # double-buffered resident RHS
           + 2 * block_m * d * itemsize                # double-buffered LHS blocks
           + 2 * block_m * 128 * 4                     # lab_col (lane-padded)
           + 2 * 8 * 2 * n_pad * 4 + 2 * 8 * 128 * 4)  # lab_row + output tiles
    vmem_limit = int(min(64 * 1024 * 1024, max(32 * 1024 * 1024, est * 5 // 4)))

    kernel = functools.partial(_contrastive_loss_kernel,
                               block_m=block_m, n_pad=n_pad, n_valid=n)

    block_tiles = pl.pallas_call(
        kernel,
        out_shape=jax.ShapeDtypeStruct((num_blocks * 8, 128), jnp.float32),
        grid_spec=pltpu.PrefetchScalarGridSpec(
            num_scalar_prefetch=0,
            grid=(num_blocks,),
            in_specs=[
                pl.BlockSpec((block_m, d), lambda i: (i, 0)),     # normalized+scaled LHS rows
                pl.BlockSpec((d, 2 * n_pad), lambda i: (0, 0)),   # resident [x|y]^T RHS
                pl.BlockSpec((block_m, 1), lambda i: (i, 0)),     # labels of the block rows
                pl.BlockSpec((1, 2 * n_pad), lambda i: (0, 0)),   # labels of all columns
            ],
            out_specs=pl.BlockSpec((8, 128), lambda i: (i, 0)),
        ),
        compiler_params=pltpu.CompilerParams(
            dimension_semantics=("parallel",),
            vmem_limit_bytes=vmem_limit,
        ),
    )(lhs, rhs, lab_col, lab_row)

    block_sums = block_tiles[0::8, 0]                   # one scalar per row-block
    return jnp.sum(block_sums) / jnp.float32(n)


def reference_loss(embed_data, embed_label, label, temperature):
    """Pure-JAX reference mirroring the PyTorch forward pass."""
    eps = 1e-8
    x = embed_data.astype(jnp.float32)
    y = embed_label.astype(jnp.float32)
    n = x.shape[0]

    def cos_mat(a, b):
        num = a @ b.T
        den = jnp.maximum(
            jnp.linalg.norm(a, axis=-1)[:, None] * jnp.linalg.norm(b, axis=-1)[None, :], eps
        )
        return num / den

    pos = (label[:, None] == label[None, :]).astype(jnp.float32)
    offdiag = ~jnp.eye(n, dtype=bool)

    ff = cos_mat(x, x)
    ff_max = jnp.max(jnp.where(offdiag, ff, -jnp.inf), axis=1, keepdims=True)
    ff_exp = jnp.where(offdiag, jnp.exp((ff - ff_max) / temperature), 0.0)

    ep = cos_mat(x, y)
    ep_max = jnp.max(ep, axis=1, keepdims=True)
    ep_exp = jnp.exp((ep - ep_max) / temperature)

    numerator = jnp.sum(pos * ep_exp, axis=1) + jnp.sum(pos * ff_exp, axis=1)
    denominator = jnp.sum(ep_exp, axis=1) + jnp.sum(ff_exp, axis=1)
    return -jnp.mean(jnp.log(numerator / denominator))


if __name__ == "__main__":
    N, D = 8, 32            # batch of 8 samples, 32-dim embeddings
    num_classes = 4
    temperature = 0.1

    key = jax.random.PRNGKey(0)
    k1, k2, k3 = jax.random.split(key, 3)
    embed_data = jax.random.normal(k1, (N, D), dtype=jnp.float32)
    embed_label = jax.random.normal(k2, (N, D), dtype=jnp.float32)
    label = jax.random.randint(k3, (N,), 0, num_classes, dtype=jnp.int32)

    loss = exhaustive_contrastive_loss(
        embed_data, embed_label, label, num_classes=num_classes, temperature=temperature
    )
    loss = jax.block_until_ready(loss)

    ref = reference_loss(embed_data, embed_label, label, temperature)
    assert bool(jnp.isfinite(loss)), f"non-finite loss: {loss}"
    assert bool(jnp.allclose(loss, ref, rtol=1e-3, atol=1e-3)), (loss, ref)
    print("KERNEL_OK")
</pallas_src>

<mosaic_0001>
module attributes {stable_mosaic.version = 11 : i64} {
  func.func @_contrastive_loss_kernel(%arg0: i32, %arg1: memref<128x32xf32, #tpu.memory_space<vmem>>, %arg2: memref<32x256xf32, #tpu.memory_space<vmem>>, %arg3: memref<128x1xi32, #tpu.memory_space<vmem>>, %arg4: memref<1x256xi32, #tpu.memory_space<vmem>>, %arg5: memref<8x128xf32, #tpu.memory_space<vmem>>) attributes {dimension_semantics = [#tpu.dimension_semantics<parallel>], iteration_bounds = array<i64: 1>, scalar_prefetch = 0 : i64, scratch_operands = 0 : i64, tpu.core_type = #tpu.core_type<tc>, window_params = [{transform_indices = @transform_0, window_bounds = array<i64: 128, 32>}, {pipeline_mode = #tpu.pipeline_mode<synchronous>, transform_indices = @transform_1, window_bounds = array<i64: 32, 256>}, {transform_indices = @transform_2, window_bounds = array<i64: 128, 1>}, {pipeline_mode = #tpu.pipeline_mode<synchronous>, transform_indices = @transform_3, window_bounds = array<i64: 1, 256>}, {transform_indices = @transform_4, window_bounds = array<i64: 8, 128>}]} {
    %c128_i32 = arith.constant 128 : i32
    %0 = arith.muli %arg0, %c128_i32 : i32
    %1 = tpu.assume_multiple %0, 128 : i32
    %c0 = arith.constant 0 : index
    %c0_0 = arith.constant 0 : index
    %2 = vector.load %arg1[%c0, %c0_0] : memref<128x32xf32, #tpu.memory_space<vmem>>, vector<128x32xf32>
    %c0_1 = arith.constant 0 : index
    %c0_2 = arith.constant 0 : index
    %3 = vector.load %arg2[%c0_1, %c0_2] : memref<32x256xf32, #tpu.memory_space<vmem>>, vector<32x256xf32>
    %cst = arith.constant dense<0.000000e+00> : vector<128x256xf32>
    %4 = tpu.matmul %2, %3, %cst {dimension_numbers = #tpu.dot_dimension_numbers<[1], [0], [0], [1], [0, 0, 1, 1], [], []>} : vector<128x32xf32>, vector<32x256xf32>, vector<128x256xf32> -> vector<128x256xf32>
    %5 = tpu.iota {dimensions = array<i32: 1>} : vector<128x256xi32>
    %c128_i32_3 = arith.constant 128 : i32
    %6 = vector.broadcast %c128_i32_3 : i32 to vector<128x256xi32>
    %7 = arith.cmpi slt, %5, %6 : vector<128x256xi32>
    %c128_i32_4 = arith.constant 128 : i32
    %8 = vector.broadcast %c128_i32_4 : i32 to vector<128x256xi32>
    %9 = arith.subi %5, %8 : vector<128x256xi32>
    %10 = arith.select %7, %5, %9 : vector<128x256xi1>, vector<128x256xi32>
    %11 = tpu.iota {dimensions = array<i32: 0>} : vector<128x256xi32>
    %12 = vector.broadcast %1 : i32 to vector<128x256xi32>
    %13 = arith.addi %12, %11 : vector<128x256xi32>
    %c8_i32 = arith.constant 8 : i32
    %14 = vector.broadcast %c8_i32 : i32 to vector<128x256xi32>
    %15 = arith.cmpi slt, %10, %14 : vector<128x256xi32>
    %cst_5 = arith.constant dense<true> : vector<128x256xi1>
    %16 = arith.xori %7, %cst_5 : vector<128x256xi1>
    %17 = arith.cmpi ne, %13, %10 : vector<128x256xi32>
    %18 = arith.ori %16, %17 : vector<128x256xi1>
    %19 = arith.andi %15, %18 : vector<128x256xi1>
    %c0_6 = arith.constant 0 : index
    %c0_7 = arith.constant 0 : index
    %20 = vector.load %arg3[%c0_6, %c0_7] : memref<128x1xi32, #tpu.memory_space<vmem>>, vector<128x1xi32>
    %c0_8 = arith.constant 0 : index
    %c0_9 = arith.constant 0 : index
    %21 = vector.load %arg4[%c0_8, %c0_9] : memref<1x256xi32, #tpu.memory_space<vmem>>, vector<1x256xi32>
    %22 = vector.broadcast %20 : vector<128x1xi32> to vector<128x256xi32>
    %23 = vector.broadcast %21 : vector<1x256xi32> to vector<128x256xi32>
    %24 = arith.cmpi eq, %22, %23 : vector<128x256xi32>
    %cst_10 = arith.constant 0xFF800000 : f32
    %25 = vector.broadcast %cst_10 : f32 to vector<128x256xf32>
    %26 = arith.select %19, %4, %25 : vector<128x256xi1>, vector<128x256xf32>
    %27 = vector.extract_strided_slice %26 {offsets = [0, 0], sizes = [128, 128], strides = [1, 1]} : vector<128x256xf32> to vector<128x128xf32>
    %cst_11 = arith.constant dense<0xFF800000> : vector<128xf32>
    %28 = vector.multi_reduction <maximumf>, %27, %cst_11 [1] : vector<128x128xf32> to vector<128xf32>
    %29 = vector.shape_cast %28 : vector<128xf32> to vector<128x1xf32>
    %30 = vector.extract_strided_slice %26 {offsets = [0, 128], sizes = [128, 128], strides = [1, 1]} : vector<128x256xf32> to vector<128x128xf32>
    %cst_12 = arith.constant dense<0xFF800000> : vector<128xf32>
    %31 = vector.multi_reduction <maximumf>, %30, %cst_12 [1] : vector<128x128xf32> to vector<128xf32>
    %32 = vector.shape_cast %31 : vector<128xf32> to vector<128x1xf32>
    %33 = vector.shape_cast %29 : vector<128x1xf32> to vector<128x1xf32>
    %34 = vector.broadcast %33 : vector<128x1xf32> to vector<128x256xf32>
    %35 = vector.shape_cast %32 : vector<128x1xf32> to vector<128x1xf32>
    %36 = vector.broadcast %35 : vector<128x1xf32> to vector<128x256xf32>
    %37 = arith.select %7, %34, %36 : vector<128x256xi1>, vector<128x256xf32>
    %38 = arith.subf %26, %37 : vector<128x256xf32>
    %39 = math.exp %38 : vector<128x256xf32>
    %cst_13 = arith.constant 0.000000e+00 : f32
    %40 = vector.broadcast %cst_13 : f32 to vector<128x256xf32>
    %41 = arith.select %24, %39, %40 : vector<128x256xi1>, vector<128x256xf32>
    %cst_14 = arith.constant dense<0.000000e+00> : vector<128xf32>
    %42 = vector.multi_reduction <add>, %41, %cst_14 [1] : vector<128x256xf32> to vector<128xf32>
    %43 = vector.shape_cast %42 : vector<128xf32> to vector<128x1xf32>
    %cst_15 = arith.constant dense<0.000000e+00> : vector<128xf32>
    %44 = vector.multi_reduction <add>, %39, %cst_15 [1] : vector<128x256xf32> to vector<128xf32>
    %45 = vector.shape_cast %44 : vector<128xf32> to vector<128x1xf32>
    %46 = arith.divf %43, %45 : vector<128x1xf32>
    %47 = math.log %46 : vector<128x1xf32>
    %cst_16 = arith.constant 0.000000e+00 : f32
    %48 = vector.broadcast %cst_16 : f32 to vector<128x1xf32>
    %49 = arith.subf %48, %47 : vector<128x1xf32>
    %50 = tpu.iota {dimensions = array<i32: 0>} : vector<128x1xi32>
    %51 = vector.broadcast %1 : i32 to vector<128x1xi32>
    %52 = arith.addi %51, %50 : vector<128x1xi32>
    %c8_i32_17 = arith.constant 8 : i32
    %53 = vector.broadcast %c8_i32_17 : i32 to vector<128x1xi32>
    %54 = arith.cmpi slt, %52, %53 : vector<128x1xi32>
    %cst_18 = arith.constant 0.000000e+00 : f32
    %55 = vector.broadcast %cst_18 : f32 to vector<128x1xf32>
    %56 = arith.select %54, %49, %55 : vector<128x1xi1>, vector<128x1xf32>
    %cst_19 = arith.constant dense<0.000000e+00> : vector<1xf32>
    %57 = vector.multi_reduction <add>, %56, %cst_19 [0] : vector<128x1xf32> to vector<1xf32>
    %58 = vector.shape_cast %57 : vector<1xf32> to vector<1x1xf32>
    %59 = vector.shape_cast %58 : vector<1x1xf32> to vector<1x1xf32>
    %60 = vector.broadcast %59 : vector<1x1xf32> to vector<8x128xf32>
    %c0_20 = arith.constant 0 : index
    %c0_21 = arith.constant 0 : index
    %61 = vector.load %arg5[%c0_20, %c0_21] : memref<8x128xf32, #tpu.memory_space<vmem>>, vector<8x128xf32>
    tpu.vector_store %arg5[%c0_20, %c0_21], %60 {strides = array<i32>} : memref<8x128xf32, #tpu.memory_space<vmem>>, vector<8x128xf32>,
    return
  }
  func.func @transform_0(%arg0: i32) -> (i32, i32) {
    %c0_i32 = arith.constant 0 : i32
    %c0_i32_0 = arith.constant 0 : i32
    return %arg0, %c0_i32 : i32, i32
  }
  func.func @transform_1(%arg0: i32) -> (i32, i32) {
    %c0_i32 = arith.constant 0 : i32
    %c0_i32_0 = arith.constant 0 : i32
    %c0_i32_1 = arith.constant 0 : i32
    return %c0_i32, %c0_i32_0 : i32, i32
  }
  func.func @transform_2(%arg0: i32) -> (i32, i32) {
    %c0_i32 = arith.constant 0 : i32
    %c0_i32_0 = arith.constant 0 : i32
    return %arg0, %c0_i32 : i32, i32
  }
  func.func @transform_3(%arg0: i32) -> (i32, i32) {
    %c0_i32 = arith.constant 0 : i32
    %c0_i32_0 = arith.constant 0 : i32
    %c0_i32_1 = arith.constant 0 : i32
    return %c0_i32, %c0_i32_0 : i32, i32
  }
  func.func @transform_4(%arg0: i32) -> (i32, i32) {
    %c0_i32 = arith.constant 0 : i32
    %c0_i32_0 = arith.constant 0 : i32
    return %arg0, %c0_i32 : i32, i32
  }
}

</mosaic_0001>

<llo_original>
// kernel: tpu_custom_call.1
$region0: #{tpu_custom_call.1}
  #allocation0 [shape = 'u32[]', space=smem, size = 0x4, offset = 0x4, fixed_abs, tag = 'smem constant byte address 0x4 - core index']
  #allocation1 [shape = 'u32[72,128]{1,0:T(1,128)}', space=vmem, size = 0x9000, scoped, tag = 'internal scratch']
  %s0 = inlined_call_operand.vmem [shape: f32[128,32], index: 0, kind: input, shape index: {}]
  %s1 = inlined_call_operand.vmem [shape: f32[32,256], index: 1, kind: input, shape index: {}]
  %s2 = inlined_call_operand.vmem [shape: s32[128,1], index: 2, kind: input, shape index: {}]
  %s3 = inlined_call_operand.vmem [shape: s32[1,256], index: 3, kind: input, shape index: {}]
  %s4 = inlined_call_operand.hbm [shape: f32[8,128], index: 4, kind: output, shape index: {}]
  %s5 = sld [smem:[#allocation0]]
  $region26: #{tpu_custom_call.1} parent=0
    _
  %s7 = ssub.s32 1, %s5
  %s8 = scalar_select 0, %s7, %s5
  $region1: #{tpu_custom_call.1} parent=0
    #allocation2 [shape = 'u8[4096]{0}', space=vmem, size = 0x1000, scoped, tag = 'output window, operand 0, single buffered']
    #allocation3 [shape = 's32[1]{0}', space=sflag, size = 0x4, scoped, tag = 'scoped memory for tpu_custom_call.1']
    %9 = vsyncpa [#allocation3], 0
    // Predicated region
    $region2: #{tpu_custom_call.1} parent=1 // pred_check
      _
    $region3: #{tpu_custom_call.1} parent=1 // pred_check_branch
      %11 = sbr.rel (0) target = $region5
    $region4: #{tpu_custom_call.1} parent=1 // pred_region
      _
    $region5: #{tpu_custom_call.1} parent=1 // pred_fallthru
      _
    // Predicated region
    $region6: #{tpu_custom_call.1} parent=1 // pred_check
      _
    $region7: #{tpu_custom_call.1} parent=1 // pred_check_branch
      %13 = sbr.rel (0) target = $region9
    $region8: #{tpu_custom_call.1} parent=1 // pred_region
      _
    $region9: #{tpu_custom_call.1} parent=1 // pred_fallthru
      _
    // Predicated region
    $region10: #{tpu_custom_call.1} parent=1 // pred_check
      _
    $region11: #{tpu_custom_call.1} parent=1 // pred_check_branch
      %15 = sbr.rel (0) target = $region13
    $region12: #{tpu_custom_call.1} parent=1 // pred_region
      _
    $region13: #{tpu_custom_call.1} parent=1 // pred_fallthru
      _
    // Predicated region
    $region14: #{tpu_custom_call.1} parent=1 // pred_check
      _
    $region15: #{tpu_custom_call.1} parent=1 // pred_check_branch
      %17 = sbr.rel (0) target = $region17
    $region16: #{tpu_custom_call.1} parent=1 // pred_region
      _
    $region17: #{tpu_custom_call.1} parent=1 // pred_fallthru
      _
    %s18 = smul.u32 0, 128
    %v19 = vld [vmem:[%s0] sm:$0xff]
    %v20 = vld [vmem:[%s0 + $0x8] sm:$0xff]
    %v21 = vld [vmem:[%s0 + $0x10] sm:$0xff]
    %v22 = vld [vmem:[%s0 + $0x18] sm:$0xff]
    %v23 = vld [vmem:[%s0 + $0x20] sm:$0xff]
    %v24 = vld [vmem:[%s0 + $0x28] sm:$0xff]
    %v25 = vld [vmem:[%s0 + $0x30] sm:$0xff]
    %v26 = vld [vmem:[%s0 + $0x38] sm:$0xff]
    %v27 = vld [vmem:[%s0 + $0x40] sm:$0xff]
    %v28 = vld [vmem:[%s0 + $0x48] sm:$0xff]
    %v29 = vld [vmem:[%s0 + $0x50] sm:$0xff]
    %v30 = vld [vmem:[%s0 + $0x58] sm:$0xff]
    %v31 = vld [vmem:[%s0 + $0x60] sm:$0xff]
    %v32 = vld [vmem:[%s0 + $0x68] sm:$0xff]
    %v33 = vld [vmem:[%s0 + $0x70] sm:$0xff]
    %v34 = vld [vmem:[%s0 + $0x78] sm:$0xff]
    %v35 = vld [vmem:[%s1] sm:$0xff]
    %v36 = vld [vmem:[%s1 + $0x8] sm:$0xff]
    %v37 = vld [vmem:[%s1 + $0x10] sm:$0xff]
    %v38 = vld [vmem:[%s1 + $0x18] sm:$0xff]
    %v39 = vld [vmem:[%s1 + $0x20] sm:$0xff]
    %v40 = vld [vmem:[%s1 + $0x28] sm:$0xff]
    %v41 = vld [vmem:[%s1 + $0x30] sm:$0xff]
    %v42 = vld [vmem:[%s1 + $0x38] sm:$0xff]
    %vm43 = vcmask 261120
    %v45 = vsel %vm43, %v19, 0
    %v48 = vsel %vm43, %v20, 0
    %v51 = vsel %vm43, %v21, 0
    %v54 = vsel %vm43, %v22, 0
    %v57 = vsel %vm43, %v23, 0
    %v60 = vsel %vm43, %v24, 0
    %v63 = vsel %vm43, %v25, 0
    %v66 = vsel %vm43, %v26, 0
    %v69 = vsel %vm43, %v27, 0
    %v72 = vsel %vm43, %v28, 0
    %v75 = vsel %vm43, %v29, 0
    %v78 = vsel %vm43, %v30, 0
    %v81 = vsel %vm43, %v31, 0
    %v84 = vsel %vm43, %v32, 0
    %v87 = vsel %vm43, %v33, 0
    %v90 = vsel %vm43, %v34, 0
    %92 = vmatpush.msra.mxu0 0.0
    %93 = vmatpush.msra.mxu0 0.0
    %94 = vmatpush.msra.mxu0 0.0
    %95 = vmatpush.msra.mxu0 0.0
    %96 = vmatpush.msra.mxu0 0.0
    %97 = vmatpush.msra.mxu0 0.0
    %98 = vmatpush.msra.mxu0 0.0
    %99 = vmatpush.msra.mxu0 0.0
    %100 = vmatpush.msra.mxu0 0.0
    %101 = vmatpush.msra.mxu0 0.0
    %102 = vmatpush.msra.mxu0 0.0
    %103 = vmatpush.msra.mxu0 0.0
    %104 = vmatpush.msra.mxu0 %v41
    %105 = vmatpush.msra.mxu0 %v39
    %106 = vmatpush.msra.mxu0 %v37
    %107 = vmatpush.msra.mxu0 %v35
    %108 = vmatmul.f32.gmra.mxu0 %v45
    %v109 = vpop.f32.mrf.mxu0
    %v110 = vadd.f32 0.0, %v109
    %111 = vmatmul.f32.gmra.mxu0 %v48
    %v112 = vpop.f32.mrf.mxu0
    %v113 = vadd.f32 0.0, %v112
    %114 = vmatmul.f32.gmra.mxu0 %v51
    %v115 = vpop.f32.mrf.mxu0
    %v116 = vadd.f32 0.0, %v115
    %117 = vmatmul.f32.gmra.mxu0 %v54
    %v118 = vpop.f32.mrf.mxu0
    %v119 = vadd.f32 0.0, %v118
    %120 = vmatmul.f32.gmra.mxu0 %v57
    %v121 = vpop.f32.mrf.mxu0
    %v122 = vadd.f32 0.0, %v121
    %123 = vmatmul.f32.gmra.mxu0 %v60
    %v124 = vpop.f32.mrf.mxu0
    %v125 = vadd.f32 0.0, %v124
    %126 = vmatmul.f32.gmra.mxu0 %v63
    %v127 = vpop.f32.mrf.mxu0
    %v128 = vadd.f32 0.0, %v127
    %129 = vmatmul.f32.gmra.mxu0 %v66
    %v130 = vpop.f32.mrf.mxu0
    %v131 = vadd.f32 0.0, %v130
    %132 = vmatmul.f32.gmra.mxu0 %v69
    %v133 = vpop.f32.mrf.mxu0
    %v134 = vadd.f32 0.0, %v133
    %135 = vmatmul.f32.gmra.mxu0 %v72
    %v136 = vpop.f32.mrf.mxu0
    %v137 = vadd.f32 0.0, %v136
    %138 = vmatmul.f32.gmra.mxu0 %v75
    %v139 = vpop.f32.mrf.mxu0
    %v140 = vadd.f32 0.0, %v139
    %141 = vmatmul.f32.gmra.mxu0 %v78
    %v142 = vpop.f32.mrf.mxu0
    %v143 = vadd.f32 0.0, %v142
    %144 = vmatmul.f32.gmra.mxu0 %v81
    %v145 = vpop.f32.mrf.mxu0
    %v146 = vadd.f32 0.0, %v145
    %147 = vmatmul.f32.gmra.mxu0 %v84
    %v148 = vpop.f32.mrf.mxu0
    %v149 = vadd.f32 0.0, %v148
    %150 = vmatmul.f32.gmra.mxu0 %v87
    %v151 = vpop.f32.mrf.mxu0
    %v152 = vadd.f32 0.0, %v151
    %153 = vmatmul.f32.gmra.mxu0 %v90
    %v154 = vpop.f32.mrf.mxu0
    %v155 = vadd.f32 0.0, %v154
    %156 = vdwg.mxu0
    %157 = vmatpush.msra.mxu0 0.0
    %158 = vmatpush.msra.mxu0 0.0
    %159 = vmatpush.msra.mxu0 0.0
    %160 = vmatpush.msra.mxu0 0.0
    %161 = vmatpush.msra.mxu0 0.0
    %162 = vmatpush.msra.mxu0 0.0
    %163 = vmatpush.msra.mxu0 0.0
    %164 = vmatpush.msra.mxu0 0.0
    %165 = vmatpush.msra.mxu0 0.0
    %166 = vmatpush.msra.mxu0 0.0
    %167 = vmatpush.msra.mxu0 0.0
    %168 = vmatpush.msra.mxu0 0.0
    %169 = vmatpush.msra.mxu0 %v42
    %170 = vmatpush.msra.mxu0 %v40
    %171 = vmatpush.msra.mxu0 %v38
    %172 = vmatpush.msra.mxu0 %v36
    %173 = vmatmul.f32.gmra.mxu0 %v45
    %v174 = vpop.f32.mrf.mxu0
    %v175 = vadd.f32 0.0, %v174
    %176 = vmatmul.f32.gmra.mxu0 %v48
    %v177 = vpop.f32.mrf.mxu0
    %v178 = vadd.f32 0.0, %v177
    %179 = vmatmul.f32.gmra.mxu0 %v51
    %v180 = vpop.f32.mrf.mxu0
    %v181 = vadd.f32 0.0, %v180
    %182 = vmatmul.f32.gmra.mxu0 %v54
    %v183 = vpop.f32.mrf.mxu0
    %v184 = vadd.f32 0.0, %v183
    %185 = vmatmul.f32.gmra.mxu0 %v57
    %v186 = vpop.f32.mrf.mxu0
    %v187 = vadd.f32 0.0, %v186
    %188 = vmatmul.f32.gmra.mxu0 %v60
    %v189 = vpop.f32.mrf.mxu0
    %v190 = vadd.f32 0.0, %v189
    %191 = vmatmul.f32.gmra.mxu0 %v63
    %v192 = vpop.f32.mrf.mxu0
    %v193 = vadd.f32 0.0, %v192
    %194 = vmatmul.f32.gmra.mxu0 %v66
    %v195 = vpop.f32.mrf.mxu0
    %v196 = vadd.f32 0.0, %v195
    %197 = vmatmul.f32.gmra.mxu0 %v69
    %v198 = vpop.f32.mrf.mxu0
    %v199 = vadd.f32 0.0, %v198
    %200 = vmatmul.f32.gmra.mxu0 %v72
    %v201 = vpop.f32.mrf.mxu0
    %v202 = vadd.f32 0.0, %v201
    %203 = vmatmul.f32.gmra.mxu0 %v75
    %v204 = vpop.f32.mrf.mxu0
    %v205 = vadd.f32 0.0, %v204
    %206 = vmatmul.f32.gmra.mxu0 %v78
    %v207 = vpop.f32.mrf.mxu0
    %v208 = vadd.f32 0.0, %v207
    %209 = vmatmul.f32.gmra.mxu0 %v81
    %v210 = vpop.f32.mrf.mxu0
    %v211 = vadd.f32 0.0, %v210
    %212 = vmatmul.f32.gmra.mxu0 %v84
    %v213 = vpop.f32.mrf.mxu0
    %v214 = vadd.f32 0.0, %v213
    %215 = vmatmul.f32.gmra.mxu0 %v87
    %v216 = vpop.f32.mrf.mxu0
    %v217 = vadd.f32 0.0, %v216
    %218 = vmatmul.f32.gmra.mxu0 %v90
    %v219 = vpop.f32.mrf.mxu0
    %v220 = vadd.f32 0.0, %v219
    %221 = vdwg.mxu0
    %v222 = vlaneseq
    %v223 = vand.u32 %v222, 127
    %v224 = vadd.s32 %v223, 128
    %vm225 = vcmp.lt.s32.totalorder %v223, 128
    %vm226 = vcmp.lt.s32.totalorder %v224, 128
    %v227 = vsub.s32 %v223, 128
    %v228 = vsel %vm225, %v223, %v227
    %v229 = vsel %vm226, %v224, %v223
    %v230 = vlaneseq
    %v231 = vshrl.u32 %v230, 7
    %v232 = vadd.s32 %v231, 8
    %v233 = vadd.s32 %v231, 16
    %v234 = vadd.s32 %v231, 24
    %v235 = vadd.s32 %v231, 32
    %v236 = vadd.s32 %v231, 40
    %v237 = vadd.s32 %v231, 48
    %v238 = vadd.s32 %v231, 56
    %v239 = vadd.s32 %v231, 64
    %v240 = vadd.s32 %v231, 72
    %v241 = vadd.s32 %v231, 80
    %v242 = vadd.s32 %v231, 88
    %v243 = vadd.s32 %v231, 96
    %v244 = vadd.s32 %v231, 104
    %v245 = vadd.s32 %v231, 112
    %v246 = vadd.s32 %v231, 120
    %v247 = vstv %s18
    %v248 = vadd.s32 %v247, %v231
    %v249 = vadd.s32 %v247, %v232
    %v250 = vadd.s32 %v247, %v233
    %v251 = vadd.s32 %v247, %v234
    %v252 = vadd.s32 %v247, %v235
    %v253 = vadd.s32 %v247, %v236
    %v254 = vadd.s32 %v247, %v237
    %v255 = vadd.s32 %v247, %v238
    %v256 = vadd.s32 %v247, %v239
    %v257 = vadd.s32 %v247, %v240
    %v258 = vadd.s32 %v247, %v241
    %v259 = vadd.s32 %v247, %v242
    %v260 = vadd.s32 %v247, %v243
    %v261 = vadd.s32 %v247, %v244
    %v262 = vadd.s32 %v247, %v245
    %v263 = vadd.s32 %v247, %v246
    %vm264 = vcmp.lt.s32.totalorder %v228, 8
    %vm265 = vcmp.lt.s32.totalorder %v229, 8
    %vm266 = vmxor %vm225, 1
    %vm267 = vmxor %vm226, 1
    %vm268 = vcmp.ne.s32.totalorder %v248, %v228
    %vm269 = vcmp.ne.s32.totalorder %v248, %v229
    %vm270 = vcmp.ne.s32.totalorder %v249, %v228
    %vm271 = vcmp.ne.s32.totalorder %v249, %v229
    %vm272 = vcmp.ne.s32.totalorder %v250, %v228
    %vm273 = vcmp.ne.s32.totalorder %v250, %v229
    %vm274 = vcmp.ne.s32.totalorder %v251, %v228
    %vm275 = vcmp.ne.s32.totalorder %v251, %v229
    %vm276 = vcmp.ne.s32.totalorder %v252, %v228
    %vm277 = vcmp.ne.s32.totalorder %v252, %v229
    %vm278 = vcmp.ne.s32.totalorder %v253, %v228
    %vm279 = vcmp.ne.s32.totalorder %v253, %v229
    %vm280 = vcmp.ne.s32.totalorder %v254, %v228
    %vm281 = vcmp.ne.s32.totalorder %v254, %v229
    %vm282 = vcmp.ne.s32.totalorder %v255, %v228
    %vm283 = vcmp.ne.s32.totalorder %v255, %v229
    %vm284 = vcmp.ne.s32.totalorder %v256, %v228
    %vm285 = vcmp.ne.s32.totalorder %v256, %v229
    %vm286 = vcmp.ne.s32.totalorder %v257, %v228
    %vm287 = vcmp.ne.s32.totalorder %v257, %v229
    %vm288 = vcmp.ne.s32.totalorder %v258, %v228
    %vm289 = vcmp.ne.s32.totalorder %v258, %v229
    %vm290 = vcmp.ne.s32.totalorder %v259, %v228
    %vm291 = vcmp.ne.s32.totalorder %v259, %v229
    %vm292 = vcmp.ne.s32.totalorder %v260, %v228
    %vm293 = vcmp.ne.s32.totalorder %v260, %v229
    %vm294 = vcmp.ne.s32.totalorder %v261, %v228
    %vm295 = vcmp.ne.s32.totalorder %v261, %v229
    %vm296 = vcmp.ne.s32.totalorder %v262, %v228
    %vm297 = vcmp.ne.s32.totalorder %v262, %v229
    %vm298 = vcmp.ne.s32.totalorder %v263, %v228
    %vm299 = vcmp.ne.s32.totalorder %v263, %v229
    %vm300 = vmor %vm266, %vm268
    %vm301 = vmor %vm267, %vm269
    %vm302 = vmor %vm266, %vm270
    %vm303 = vmor %vm267, %vm271
    %vm304 = vmor %vm266, %vm272
    %vm305 = vmor %vm267, %vm273
    %vm306 = vmor %vm266, %vm274
    %vm307 = vmor %vm267, %vm275
    %vm308 = vmor %vm266, %vm276
    %vm309 = vmor %vm267, %vm277
    %vm310 = vmor %vm266, %vm278
    %vm311 = vmor %vm267, %vm279
    %vm312 = vmor %vm266, %vm280
    %vm313 = vmor %vm267, %vm281
    %vm314 = vmor %vm266, %vm282
    %vm315 = vmor %vm267, %vm283
    %vm316 = vmor %vm266, %vm284
    %vm317 = vmor %vm267, %vm285
    %vm318 = vmor %vm266, %vm286
    %vm319 = vmor %vm267, %vm287
    %vm320 = vmor %vm266, %vm288
    %vm321 = vmor %vm267, %vm289
    %vm322 = vmor %vm266, %vm290
    %vm323 = vmor %vm267, %vm291
    %vm324 = vmor %vm266, %vm292
    %vm325 = vmor %vm267, %vm293
    %vm326 = vmor %vm266, %vm294
    %vm327 = vmor %vm267, %vm295
    %vm328 = vmor %vm266, %vm296
    %vm329 = vmor %vm267, %vm297
    %vm330 = vmor %vm266, %vm298
    %vm331 = vmor %vm267, %vm299
    %vm332 = vmand %vm264, %vm300
    %vm333 = vmand %vm265, %vm301
    %vm334 = vmand %vm264, %vm302
    %vm335 = vmand %vm265, %vm303
    %vm336 = vmand %vm264, %vm304
    %vm337 = vmand %vm265, %vm305
    %vm338 = vmand %vm264, %vm306
    %vm339 = vmand %vm265, %vm307
    %vm340 = vmand %vm264, %vm308
    %vm341 = vmand %vm265, %vm309
    %vm342 = vmand %vm264, %vm310
    %vm343 = vmand %vm265, %vm311
    %vm344 = vmand %vm264, %vm312
    %vm345 = vmand %vm265, %vm313
    %vm346 = vmand %vm264, %vm314
    %vm347 = vmand %vm265, %vm315
    %vm348 = vmand %vm264, %vm316
    %vm349 = vmand %vm265, %vm317
    %vm350 = vmand %vm264, %vm318
    %vm351 = vmand %vm265, %vm319
    %vm352 = vmand %vm264, %vm320
    %vm353 = vmand %vm265, %vm321
    %vm354 = vmand %vm264, %vm322
    %vm355 = vmand %vm265, %vm323
    %vm356 = vmand %vm264, %vm324
    %vm357 = vmand %vm265, %vm325
    %vm358 = vmand %vm264, %vm326
    %vm359 = vmand %vm265, %vm327
    %vm360 = vmand %vm264, %vm328
    %vm361 = vmand %vm265, %vm329
    %vm362 = vmand %vm264, %vm330
    %vm363 = vmand %vm265, %vm331
    %v364 = vld [vmem:[%s2] sm:$0xff]
    %v365 = vld [vmem:[%s2 + $0x8] sm:$0xff]
    %v366 = vld [vmem:[%s2 + $0x10] sm:$0xff]
    %v367 = vld [vmem:[%s2 + $0x18] sm:$0xff]
    %v368 = vld [vmem:[%s2 + $0x20] sm:$0xff]
    %v369 = vld [vmem:[%s2 + $0x28] sm:$0xff]
    %v370 = vld [vmem:[%s2 + $0x30] sm:$0xff]
    %v371 = vld [vmem:[%s2 + $0x38] sm:$0xff]
    %v372 = vld [vmem:[%s2 + $0x40] sm:$0xff]
    %v373 = vld [vmem:[%s2 + $0x48] sm:$0xff]
    %v374 = vld [vmem:[%s2 + $0x50] sm:$0xff]
    %v375 = vld [vmem:[%s2 + $0x58] sm:$0xff]
    %v376 = vld [vmem:[%s2 + $0x60] sm:$0xff]
    %v377 = vld [vmem:[%s2 + $0x68] sm:$0xff]
    %v378 = vld [vmem:[%s2 + $0x70] sm:$0xff]
    %v379 = vld [vmem:[%s2 + $0x78] sm:$0xff]
    %v380 = vld [vmem:[%s3] sm:$0x3]
    %381 = vset.pattern.permute.xlu0 0
    %382 = vperm.xlu0 %381, %v364
    %v383 = vpop.permute.xlu0 %382
    %384 = vset.pattern.permute.xlu0 0
    %385 = vperm.xlu0 %384, %v365
    %v386 = vpop.permute.xlu0 %385
    %387 = vset.pattern.permute.xlu0 0
    %388 = vperm.xlu0 %387, %v366
    %v389 = vpop.permute.xlu0 %388
    %390 = vset.pattern.permute.xlu0 0
    %391 = vperm.xlu0 %390, %v367
    %v392 = vpop.permute.xlu0 %391
    %393 = vset.pattern.permute.xlu0 0
    %394 = vperm.xlu0 %393, %v368
    %v395 = vpop.permute.xlu0 %394
    %396 = vset.pattern.permute.xlu0 0
    %397 = vperm.xlu0 %396, %v369
    %v398 = vpop.permute.xlu0 %397
    %399 = vset.pattern.permute.xlu0 0
    %400 = vperm.xlu0 %399, %v370
    %v401 = vpop.permute.xlu0 %400
    %402 = vset.pattern.permute.xlu0 0
    %403 = vperm.xlu0 %402, %v371
    %v404 = vpop.permute.xlu0 %403
    %405 = vset.pattern.permute.xlu0 0
    %406 = vperm.xlu0 %405, %v372
    %v407 = vpop.permute.xlu0 %406
    %408 = vset.pattern.permute.xlu0 0
    %409 = vperm.xlu0 %408, %v373
    %v410 = vpop.permute.xlu0 %409
    %411 = vset.pattern.permute.xlu0 0
    %412 = vperm.xlu0 %411, %v374
    %v413 = vpop.permute.xlu0 %412
    %414 = vset.pattern.permute.xlu0 0
    %415 = vperm.xlu0 %414, %v375
    %v416 = vpop.permute.xlu0 %415
    %417 = vset.pattern.permute.xlu0 0
    %418 = vperm.xlu0 %417, %v376
    %v419 = vpop.permute.xlu0 %418
    %420 = vset.pattern.permute.xlu0 0
    %421 = vperm.xlu0 %420, %v377
    %v422 = vpop.permute.xlu0 %421
    %423 = vset.pattern.permute.xlu0 0
    %424 = vperm.xlu0 %423, %v378
    %v425 = vpop.permute.xlu0 %424
    %426 = vset.pattern.permute.xlu0 0
    %427 = vperm.xlu0 %426, %v379
    %v428 = vpop.permute.xlu0 %427
    %v429 = vperm.slane %v380, 0
    %v430 = vperm.slane %v380, 1
    %vm431 = vcmp.eq.s32.totalorder %v383, %v429
    %vm432 = vcmp.eq.s32.totalorder %v383, %v430
    %vm433 = vcmp.eq.s32.totalorder %v386, %v429
    %vm434 = vcmp.eq.s32.totalorder %v386, %v430
    %vm435 = vcmp.eq.s32.totalorder %v389, %v429
    %vm436 = vcmp.eq.s32.totalorder %v389, %v430
    %vm437 = vcmp.eq.s32.totalorder %v392, %v429
    %vm438 = vcmp.eq.s32.totalorder %v392, %v430
    %vm439 = vcmp.eq.s32.totalorder %v395, %v429
    %vm440 = vcmp.eq.s32.totalorder %v395, %v430
    %vm441 = vcmp.eq.s32.totalorder %v398, %v429
    %vm442 = vcmp.eq.s32.totalorder %v398, %v430
    %vm443 = vcmp.eq.s32.totalorder %v401, %v429
    %vm444 = vcmp.eq.s32.totalorder %v401, %v430
    %vm445 = vcmp.eq.s32.totalorder %v404, %v429
    %vm446 = vcmp.eq.s32.totalorder %v404, %v430
    %vm447 = vcmp.eq.s32.totalorder %v407, %v429
    %vm448 = vcmp.eq.s32.totalorder %v407, %v430
    %vm449 = vcmp.eq.s32.totalorder %v410, %v429
    %vm450 = vcmp.eq.s32.totalorder %v410, %v430
    %vm451 = vcmp.eq.s32.totalorder %v413, %v429
    %vm452 = vcmp.eq.s32.totalorder %v413, %v430
    %vm453 = vcmp.eq.s32.totalorder %v416, %v429
    %vm454 = vcmp.eq.s32.totalorder %v416, %v430
    %vm455 = vcmp.eq.s32.totalorder %v419, %v429
    %vm456 = vcmp.eq.s32.totalorder %v419, %v430
    %vm457 = vcmp.eq.s32.totalorder %v422, %v429
    %vm458 = vcmp.eq.s32.totalorder %v422, %v430
    %vm459 = vcmp.eq.s32.totalorder %v425, %v429
    %vm460 = vcmp.eq.s32.totalorder %v425, %v430
    %vm461 = vcmp.eq.s32.totalorder %v428, %v429
    %vm462 = vcmp.eq.s32.totalorder %v428, %v430
    %v463 = vsel %vm332, %v110, -inf
    %v464 = vsel %vm333, %v175, -inf
    %v465 = vsel %vm334, %v113, -inf
    %v466 = vsel %vm335, %v178, -inf
    %v467 = vsel %vm336, %v116, -inf
    %v468 = vsel %vm337, %v181, -inf
    %v469 = vsel %vm338, %v119, -inf
    %v470 = vsel %vm339, %v184, -inf
    %v471 = vsel %vm340, %v122, -inf
    %v472 = vsel %vm341, %v187, -inf
    %v473 = vsel %vm342, %v125, -inf
    %v474 = vsel %vm343, %v190, -inf
    %v475 = vsel %vm344, %v128, -inf
    %v476 = vsel %vm345, %v193, -inf
    %v477 = vsel %vm346, %v131, -inf
    %v478 = vsel %vm347, %v196, -inf
    %v479 = vsel %vm348, %v134, -inf
    %v480 = vsel %vm349, %v199, -inf
    %v481 = vsel %vm350, %v137, -inf
    %v482 = vsel %vm351, %v202, -inf
    %v483 = vsel %vm352, %v140, -inf
    %v484 = vsel %vm353, %v205, -inf
    %v485 = vsel %vm354, %v143, -inf
    %v486 = vsel %vm355, %v208, -inf
    %v487 = vsel %vm356, %v146, -inf
    %v488 = vsel %vm357, %v211, -inf
    %v489 = vsel %vm358, %v149, -inf
    %v490 = vsel %vm359, %v214, -inf
    %v491 = vsel %vm360, %v152, -inf
    %v492 = vsel %vm361, %v217, -inf
    %v493 = vsel %vm362, %v155, -inf
    %v494 = vsel %vm363, %v220, -inf
    %495 = vmax.xlane.f32.xlu0 %v463
    %v496 = vpop.xlane.xlu0 %495
    %497 = vmax.xlane.f32.xlu0 %v465
    %v498 = vpop.xlane.xlu0 %497
    %499 = vmax.xlane.f32.xlu0 %v467
    %v500 = vpop.xlane.xlu0 %499
    %501 = vmax.xlane.f32.xlu0 %v469
    %v502 = vpop.xlane.xlu0 %501
    %503 = vmax.xlane.f32.xlu0 %v471
    %v504 = vpop.xlane.xlu0 %503
    %505 = vmax.xlane.f32.xlu0 %v473
    %v506 = vpop.xlane.xlu0 %505
    %507 = vmax.xlane.f32.xlu0 %v475
    %v508 = vpop.xlane.xlu0 %507
    %509 = vmax.xlane.f32.xlu0 %v477
    %v510 = vpop.xlane.xlu0 %509
    %511 = vmax.xlane.f32.xlu0 %v479
    %v512 = vpop.xlane.xlu0 %511
    %513 = vmax.xlane.f32.xlu0 %v481
    %v514 = vpop.xlane.xlu0 %513
    %515 = vmax.xlane.f32.xlu0 %v483
    %v516 = vpop.xlane.xlu0 %515
    %517 = vmax.xlane.f32.xlu0 %v485
    %v518 = vpop.xlane.xlu0 %517
    %519 = vmax.xlane.f32.xlu0 %v487
    %v520 = vpop.xlane.xlu0 %519
    %521 = vmax.xlane.f32.xlu0 %v489
    %v522 = vpop.xlane.xlu0 %521
    %523 = vmax.xlane.f32.xlu0 %v491
    %v524 = vpop.xlane.xlu0 %523
    %525 = vmax.xlane.f32.xlu0 %v493
    %v526 = vpop.xlane.xlu0 %525
    %527 = vmax.xlane.f32.xlu0 %v464
    %v528 = vpop.xlane.xlu0 %527
    %529 = vmax.xlane.f32.xlu0 %v466
    %v530 = vpop.xlane.xlu0 %529
    %531 = vmax.xlane.f32.xlu0 %v468
    %v532 = vpop.xlane.xlu0 %531
    %533 = vmax.xlane.f32.xlu0 %v470
    %v534 = vpop.xlane.xlu0 %533
    %535 = vmax.xlane.f32.xlu0 %v472
    %v536 = vpop.xlane.xlu0 %535
    %537 = vmax.xlane.f32.xlu0 %v474
    %v538 = vpop.xlane.xlu0 %537
    %539 = vmax.xlane.f32.xlu0 %v476
    %v540 = vpop.xlane.xlu0 %539
    %541 = vmax.xlane.f32.xlu0 %v478
    %v542 = vpop.xlane.xlu0 %541
    %543 = vmax.xlane.f32.xlu0 %v480
    %v544 = vpop.xlane.xlu0 %543
    %545 = vmax.xlane.f32.xlu0 %v482
    %v546 = vpop.xlane.xlu0 %545
    %547 = vmax.xlane.f32.xlu0 %v484
    %v548 = vpop.xlane.xlu0 %547
    %549 = vmax.xlane.f32.xlu0 %v486
    %v550 = vpop.xlane.xlu0 %549
    %551 = vmax.xlane.f32.xlu0 %v488
    %v552 = vpop.xlane.xlu0 %551
    %553 = vmax.xlane.f32.xlu0 %v490
    %v554 = vpop.xlane.xlu0 %553
    %555 = vmax.xlane.f32.xlu0 %v492
    %v556 = vpop.xlane.xlu0 %555
    %557 = vmax.xlane.f32.xlu0 %v494
    %v558 = vpop.xlane.xlu0 %557
    %v559 = vsel %vm225, %v496, %v528
    %v560 = vsel %vm226, %v496, %v528
    %v561 = vsel %vm225, %v498, %v530
    %v562 = vsel %vm226, %v498, %v530
    %v563 = vsel %vm225, %v500, %v532
    %v564 = vsel %vm226, %v500, %v532
    %v565 = vsel %vm225, %v502, %v534
    %v566 = vsel %vm226, %v502, %v534
    %v567 = vsel %vm225, %v504, %v536
    %v568 = vsel %vm226, %v504, %v536
    %v569 = vsel %vm225, %v506, %v538
    %v570 = vsel %vm226, %v506, %v538
    %v571 = vsel %vm225, %v508, %v540
    %v572 = vsel %vm226, %v508, %v540
    %v573 = vsel %vm225, %v510, %v542
    %v574 = vsel %vm226, %v510, %v542
    %v575 = vsel %vm225, %v512, %v544
    %v576 = vsel %vm226, %v512, %v544
    %v577 = vsel %vm225, %v514, %v546
    %v578 = vsel %vm226, %v514, %v546
    %v579 = vsel %vm225, %v516, %v548
    %v580 = vsel %vm226, %v516, %v548
    %v581 = vsel %vm225, %v518, %v550
    %v582 = vsel %vm226, %v518, %v550
    %v583 = vsel %vm225, %v520, %v552
    %v584 = vsel %vm226, %v520, %v552
    %v585 = vsel %vm225, %v522, %v554
    %v586 = vsel %vm226, %v522, %v554
    %v587 = vsel %vm225, %v524, %v556
    %v588 = vsel %vm226, %v524, %v556
    %v589 = vsel %vm225, %v526, %v558
    %v590 = vsel %vm226, %v526, %v558
    %v591 = vsub.f32 %v463, %v559
    %v592 = vsub.f32 %v464, %v560
    %v593 = vsub.f32 %v465, %v561
    %v594 = vsub.f32 %v466, %v562
    %v595 = vsub.f32 %v467, %v563
    %v596 = vsub.f32 %v468, %v564
    %v597 = vsub.f32 %v469, %v565
    %v598 = vsub.f32 %v470, %v566
    %v599 = vsub.f32 %v471, %v567
    %v600 = vsub.f32 %v472, %v568
    %v601 = vsub.f32 %v473, %v569
    %v602 = vsub.f32 %v474, %v570
    %v603 = vsub.f32 %v475, %v571
    %v604 = vsub.f32 %v476, %v572
    %v605 = vsub.f32 %v477, %v573
    %v606 = vsub.f32 %v478, %v574
    %v607 = vsub.f32 %v479, %v575
    %v608 = vsub.f32 %v480, %v576
    %v609 = vsub.f32 %v481, %v577
    %v610 = vsub.f32 %v482, %v578
    %v611 = vsub.f32 %v483, %v579
    %v612 = vsub.f32 %v484, %v580
    %v613 = vsub.f32 %v485, %v581
    %v614 = vsub.f32 %v486, %v582
    %v615 = vsub.f32 %v487, %v583
    %v616 = vsub.f32 %v488, %v584
    %v617 = vsub.f32 %v489, %v585
    %v618 = vsub.f32 %v490, %v586
    %v619 = vsub.f32 %v491, %v587
    %v620 = vsub.f32 %v492, %v588
    %v621 = vsub.f32 %v493, %v589
    %v622 = vsub.f32 %v494, %v590
    %v623 = vmul.f32 %v591, 1.442695
    %v624 = vpow.pop %v623
    %v625 = vmul.f32 %v592, 1.442695
    %v626 = vpow.pop %v625
    %v627 = vmul.f32 %v593, 1.442695
    %v628 = vpow.pop %v627
    %v629 = vmul.f32 %v594, 1.442695
    %v630 = vpow.pop %v629
    %v631 = vmul.f32 %v595, 1.442695
    %v632 = vpow.pop %v631
    %v633 = vmul.f32 %v596, 1.442695
    %v634 = vpow.pop %v633
    %v635 = vmul.f32 %v597, 1.442695
    %v636 = vpow.pop %v635
    %v637 = vmul.f32 %v598, 1.442695
    %v638 = vpow.pop %v637
    %v639 = vmul.f32 %v599, 1.442695
    %v640 = vpow.pop %v639
    %v641 = vmul.f32 %v600, 1.442695
    %v642 = vpow.pop %v641
    %v643 = vmul.f32 %v601, 1.442695
    %v644 = vpow.pop %v643
    %v645 = vmul.f32 %v602, 1.442695
    %v646 = vpow.pop %v645
    %v647 = vmul.f32 %v603, 1.442695
    %v648 = vpow.pop %v647
    %v649 = vmul.f32 %v604, 1.442695
    %v650 = vpow.pop %v649
    %v651 = vmul.f32 %v605, 1.442695
    %v652 = vpow.pop %v651
    %v653 = vmul.f32 %v606, 1.442695
    %v654 = vpow.pop %v653
    %v655 = vmul.f32 %v607, 1.442695
    %v656 = vpow.pop %v655
    %v657 = vmul.f32 %v608, 1.442695
    %v658 = vpow.pop %v657
    %v659 = vmul.f32 %v609, 1.442695
    %v660 = vpow.pop %v659
    %v661 = vmul.f32 %v610, 1.442695
    %v662 = vpow.pop %v661
    %v663 = vmul.f32 %v611, 1.442695
    %v664 = vpow.pop %v663
    %v665 = vmul.f32 %v612, 1.442695
    %v666 = vpow.pop %v665
    %v667 = vmul.f32 %v613, 1.442695
    %v668 = vpow.pop %v667
    %v669 = vmul.f32 %v614, 1.442695
    %v670 = vpow.pop %v669
    %v671 = vmul.f32 %v615, 1.442695
    %v672 = vpow.pop %v671
    %v673 = vmul.f32 %v616, 1.442695
    %v674 = vpow.pop %v673
    %v675 = vmul.f32 %v617, 1.442695
    %v676 = vpow.pop %v675
    %v677 = vmul.f32 %v618, 1.442695
    %v678 = vpow.pop %v677
    %v679 = vmul.f32 %v619, 1.442695
    %v680 = vpow.pop %v679
    %v681 = vmul.f32 %v620, 1.442695
    %v682 = vpow.pop %v681
    %v683 = vmul.f32 %v621, 1.442695
    %v684 = vpow.pop %v683
    %v685 = vmul.f32 %v622, 1.442695
    %v686 = vpow.pop %v685
    %v687 = vsel %vm431, %v624, 0.0
    %v688 = vsel %vm432, %v626, 0.0
    %v689 = vsel %vm433, %v628, 0.0
    %v690 = vsel %vm434, %v630, 0.0
    %v691 = vsel %vm435, %v632, 0.0
    %v692 = vsel %vm436, %v634, 0.0
    %v693 = vsel %vm437, %v636, 0.0
    %v694 = vsel %vm438, %v638, 0.0
    %v695 = vsel %vm439, %v640, 0.0
    %v696 = vsel %vm440, %v642, 0.0
    %v697 = vsel %vm441, %v644, 0.0
    %v698 = vsel %vm442, %v646, 0.0
    %v699 = vsel %vm443, %v648, 0.0
    %v700 = vsel %vm444, %v650, 0.0
    %v701 = vsel %vm445, %v652, 0.0
    %v702 = vsel %vm446, %v654, 0.0
    %v703 = vsel %vm447, %v656, 0.0
    %v704 = vsel %vm448, %v658, 0.0
    %v705 = vsel %vm449, %v660, 0.0
    %v706 = vsel %vm450, %v662, 0.0
    %v707 = vsel %vm451, %v664, 0.0
    %v708 = vsel %vm452, %v666, 0.0
    %v709 = vsel %vm453, %v668, 0.0
    %v710 = vsel %vm454, %v670, 0.0
    %v711 = vsel %vm455, %v672, 0.0
    %v712 = vsel %vm456, %v674, 0.0
    %v713 = vsel %vm457, %v676, 0.0
    %v714 = vsel %vm458, %v678, 0.0
    %v715 = vsel %vm459, %v680, 0.0
    %v716 = vsel %vm460, %v682, 0.0
    %v717 = vsel %vm461, %v684, 0.0
    %v718 = vsel %vm462, %v686, 0.0
    %v719 = vadd.f32 %v687, %v688
    %720 = vadd.xlane.f32.xlu0 %v719
    %v721 = vpop.xlane.xlu0 %720
    %v722 = vadd.f32 %v689, %v690
    %723 = vadd.xlane.f32.xlu0 %v722
    %v724 = vpop.xlane.xlu0 %723
    %v725 = vadd.f32 %v691, %v692
    %726 = vadd.xlane.f32.xlu0 %v725
    %v727 = vpop.xlane.xlu0 %726
    %v728 = vadd.f32 %v693, %v694
    %729 = vadd.xlane.f32.xlu0 %v728
    %v730 = vpop.xlane.xlu0 %729
    %v731 = vadd.f32 %v695, %v696
    %732 = vadd.xlane.f32.xlu0 %v731
    %v733 = vpop.xlane.xlu0 %732
    %v734 = vadd.f32 %v697, %v698
    %735 = vadd.xlane.f32.xlu0 %v734
    %v736 = vpop.xlane.xlu0 %735
    %v737 = vadd.f32 %v699, %v700
    %738 = vadd.xlane.f32.xlu0 %v737
    %v739 = vpop.xlane.xlu0 %738
    %v740 = vadd.f32 %v701, %v702
    %741 = vadd.xlane.f32.xlu0 %v740
    %v742 = vpop.xlane.xlu0 %741
    %v743 = vadd.f32 %v703, %v704
    %744 = vadd.xlane.f32.xlu0 %v743
    %v745 = vpop.xlane.xlu0 %744
    %v746 = vadd.f32 %v705, %v706
    %747 = vadd.xlane.f32.xlu0 %v746
    %v748 = vpop.xlane.xlu0 %747
    %v749 = vadd.f32 %v707, %v708
    %750 = vadd.xlane.f32.xlu0 %v749
    %v751 = vpop.xlane.xlu0 %750
    %v752 = vadd.f32 %v709, %v710
    %753 = vadd.xlane.f32.xlu0 %v752
    %v754 = vpop.xlane.xlu0 %753
    %v755 = vadd.f32 %v711, %v712
    %756 = vadd.xlane.f32.xlu0 %v755
    %v757 = vpop.xlane.xlu0 %756
    %v758 = vadd.f32 %v713, %v714
    %759 = vadd.xlane.f32.xlu0 %v758
    %v760 = vpop.xlane.xlu0 %759
    %v761 = vadd.f32 %v715, %v716
    %762 = vadd.xlane.f32.xlu0 %v761
    %v763 = vpop.xlane.xlu0 %762
    %v764 = vadd.f32 %v717, %v718
    %765 = vadd.xlane.f32.xlu0 %v764
    %v766 = vpop.xlane.xlu0 %765
    %v767 = vadd.f32 %v624, %v626
    %768 = vadd.xlane.f32.xlu0 %v767
    %v769 = vpop.xlane.xlu0 %768
    %v770 = vadd.f32 %v628, %v630
    %771 = vadd.xlane.f32.xlu0 %v770
    %v772 = vpop.xlane.xlu0 %771
    %v773 = vadd.f32 %v632, %v634
    %774 = vadd.xlane.f32.xlu0 %v773
    %v775 = vpop.xlane.xlu0 %774
    %v776 = vadd.f32 %v636, %v638
    %777 = vadd.xlane.f32.xlu0 %v776
    %v778 = vpop.xlane.xlu0 %777
    %v779 = vadd.f32 %v640, %v642
    %780 = vadd.xlane.f32.xlu0 %v779
    %v781 = vpop.xlane.xlu0 %780
    %v782 = vadd.f32 %v644, %v646
    %783 = vadd.xlane.f32.xlu0 %v782
    %v784 = vpop.xlane.xlu0 %783
    %v785 = vadd.f32 %v648, %v650
    %786 = vadd.xlane.f32.xlu0 %v785
    %v787 = vpop.xlane.xlu0 %786
    %v788 = vadd.f32 %v652, %v654
    %789 = vadd.xlane.f32.xlu0 %v788
    %v790 = vpop.xlane.xlu0 %789
    %v791 = vadd.f32 %v656, %v658
    %792 = vadd.xlane.f32.xlu0 %v791
    %v793 = vpop.xlane.xlu0 %792
    %v794 = vadd.f32 %v660, %v662
    %795 = vadd.xlane.f32.xlu0 %v794
    %v796 = vpop.xlane.xlu0 %795
    %v797 = vadd.f32 %v664, %v666
    %798 = vadd.xlane.f32.xlu0 %v797
    %v799 = vpop.xlane.xlu0 %798
    %v800 = vadd.f32 %v668, %v670
    %801 = vadd.xlane.f32.xlu0 %v800
    %v802 = vpop.xlane.xlu0 %801
    %v803 = vadd.f32 %v672, %v674
    %804 = vadd.xlane.f32.xlu0 %v803
    %v805 = vpop.xlane.xlu0 %804
    %v806 = vadd.f32 %v676, %v678
    %807 = vadd.xlane.f32.xlu0 %v806
    %v808 = vpop.xlane.xlu0 %807
    %v809 = vadd.f32 %v680, %v682
    %810 = vadd.xlane.f32.xlu0 %v809
    %v811 = vpop.xlane.xlu0 %810
    %v812 = vadd.f32 %v684, %v686
    %813 = vadd.xlane.f32.xlu0 %v812
    %v814 = vpop.xlane.xlu0 %813
    %v815 = vrcp.pop %v769
    %v816 = vmul.f32 %v769, %v815
    %v817 = vsub.f32 1.0, %v816
    %v818 = vmul.f32 %v815, %v817
    %v819 = vadd.f32 %v815, %v818
    %vm820 = vweird.f32 %v769
    %vm821 = vweird.f32 %v815
    %vm822 = vmor %vm820, %vm821
    %v823 = vsel %vm822, %v815, %v819
    %v824 = vand.u32 2147483647, %v769
    %vm825 = vcmp.eq.f32.partialorder %v824, 8.507059e+37
    %v826 = vand.u32 %v769, 2147483648
    %v827 = vor.u32 1.1754944e-38, %v826
    %v828 = vsel %vm825, %v827, %v823
    %v829 = vmul.f32 %v721, %v828
    %v830 = vrcp.pop %v772
    %v831 = vmul.f32 %v772, %v830
    %v832 = vsub.f32 1.0, %v831
    %v833 = vmul.f32 %v830, %v832
    %v834 = vadd.f32 %v830, %v833
    %vm835 = vweird.f32 %v772
    %vm836 = vweird.f32 %v830
    %vm837 = vmor %vm835, %vm836
    %v838 = vsel %vm837, %v830, %v834
    %v839 = vand.u32 2147483647, %v772
    %vm840 = vcmp.eq.f32.partialorder %v839, 8.507059e+37
    %v841 = vand.u32 %v772, 2147483648
    %v842 = vor.u32 1.1754944e-38, %v841
    %v843 = vsel %vm840, %v842, %v838
    %v844 = vmul.f32 %v724, %v843
    %v845 = vrcp.pop %v775
    %v846 = vmul.f32 %v775, %v845
    %v847 = vsub.f32 1.0, %v846
    %v848 = vmul.f32 %v845, %v847
    %v849 = vadd.f32 %v845, %v848
    %vm850 = vweird.f32 %v775
    %vm851 = vweird.f32 %v845
    %vm852 = vmor %vm850, %vm851
    %v853 = vsel %vm852, %v845, %v849
    %v854 = vand.u32 2147483647, %v775
    %vm855 = vcmp.eq.f32.partialorder %v854, 8.507059e+37
    %v856 = vand.u32 %v775, 2147483648
    %v857 = vor.u32 1.1754944e-38, %v856
    %v858 = vsel %vm855, %v857, %v853
    %v859 = vmul.f32 %v727, %v858
    %v860 = vrcp.pop %v778
    %v861 = vmul.f32 %v778, %v860
    %v862 = vsub.f32 1.0, %v861
    %v863 = vmul.f32 %v860, %v862
    %v864 = vadd.f32 %v860, %v863
    %vm865 = vweird.f32 %v778
    %vm866 = vweird.f32 %v860
    %vm867 = vmor %vm865, %vm866
    %v868 = vsel %vm867, %v860, %v864
    %v869 = vand.u32 2147483647, %v778
    %vm870 = vcmp.eq.f32.partialorder %v869, 8.507059e+37
    %v871 = vand.u32 %v778, 2147483648
    %v872 = vor.u32 1.1754944e-38, %v871
    %v873 = vsel %vm870, %v872, %v868
    %v874 = vmul.f32 %v730, %v873
    %v875 = vrcp.pop %v781
    %v876 = vmul.f32 %v781, %v875
    %v877 = vsub.f32 1.0, %v876
    %v878 = vmul.f32 %v875, %v877
    %v879 = vadd.f32 %v875, %v878
    %vm880 = vweird.f32 %v781
    %vm881 = vweird.f32 %v875
    %vm882 = vmor %vm880, %vm881
    %v883 = vsel %vm882, %v875, %v879
    %v884 = vand.u32 2147483647, %v781
    %vm885 = vcmp.eq.f32.partialorder %v884, 8.507059e+37
    %v886 = vand.u32 %v781, 2147483648
    %v887 = vor.u32 1.1754944e-38, %v886
    %v888 = vsel %vm885, %v887, %v883
    %v889 = vmul.f32 %v733, %v888
    %v890 = vrcp.pop %v784
    %v891 = vmul.f32 %v784, %v890
    %v892 = vsub.f32 1.0, %v891
    %v893 = vmul.f32 %v890, %v892
    %v894 = vadd.f32 %v890, %v893
    %vm895 = vweird.f32 %v784
    %vm896 = vweird.f32 %v890
    %vm897 = vmor %vm895, %vm896
    %v898 = vsel %vm897, %v890, %v894
    %v899 = vand.u32 2147483647, %v784
    %vm900 = vcmp.eq.f32.partialorder %v899, 8.507059e+37
    %v901 = vand.u32 %v784, 2147483648
    %v902 = vor.u32 1.1754944e-38, %v901
    %v903 = vsel %vm900, %v902, %v898
    %v904 = vmul.f32 %v736, %v903
    %v905 = vrcp.pop %v787
    %v906 = vmul.f32 %v787, %v905
    %v907 = vsub.f32 1.0, %v906
    %v908 = vmul.f32 %v905, %v907
    %v909 = vadd.f32 %v905, %v908
    %vm910 = vweird.f32 %v787
    %vm911 = vweird.f32 %v905
    %vm912 = vmor %vm910, %vm911
    %v913 = vsel %vm912, %v905, %v909
    %v914 = vand.u32 2147483647, %v787
    %vm915 = vcmp.eq.f32.partialorder %v914, 8.507059e+37
    %v916 = vand.u32 %v787, 2147483648
    %v917 = vor.u32 1.1754944e-38, %v916
    %v918 = vsel %vm915, %v917, %v913
    %v919 = vmul.f32 %v739, %v918
    %v920 = vrcp.pop %v790
    %v921 = vmul.f32 %v790, %v920
    %v922 = vsub.f32 1.0, %v921
    %v923 = vmul.f32 %v920, %v922
    %v924 = vadd.f32 %v920, %v923
    %vm925 = vweird.f32 %v790
    %vm926 = vweird.f32 %v920
    %vm927 = vmor %vm925, %vm926
    %v928 = vsel %vm927, %v920, %v924
    %v929 = vand.u32 2147483647, %v790
    %vm930 = vcmp.eq.f32.partialorder %v929, 8.507059e+37
    %v931 = vand.u32 %v790, 2147483648
    %v932 = vor.u32 1.1754944e-38, %v931
    %v933 = vsel %vm930, %v932, %v928
    %v934 = vmul.f32 %v742, %v933
    %v935 = vrcp.pop %v793
    %v936 = vmul.f32 %v793, %v935
    %v937 = vsub.f32 1.0, %v936
    %v938 = vmul.f32 %v935, %v937
    %v939 = vadd.f32 %v935, %v938
    %vm940 = vweird.f32 %v793
    %vm941 = vweird.f32 %v935
    %vm942 = vmor %vm940, %vm941
    %v943 = vsel %vm942, %v935, %v939
    %v944 = vand.u32 2147483647, %v793
    %vm945 = vcmp.eq.f32.partialorder %v944, 8.507059e+37
    %v946 = vand.u32 %v793, 2147483648
    %v947 = vor.u32 1.1754944e-38, %v946
    %v948 = vsel %vm945, %v947, %v943
    %v949 = vmul.f32 %v745, %v948
    %v950 = vrcp.pop %v796
    %v951 = vmul.f32 %v796, %v950
    %v952 = vsub.f32 1.0, %v951
    %v953 = vmul.f32 %v950, %v952
    %v954 = vadd.f32 %v950, %v953
    %vm955 = vweird.f32 %v796
    %vm956 = vweird.f32 %v950
    %vm957 = vmor %vm955, %vm956
    %v958 = vsel %vm957, %v950, %v954
    %v959 = vand.u32 2147483647, %v796
    %vm960 = vcmp.eq.f32.partialorder %v959, 8.507059e+37
    %v961 = vand.u32 %v796, 2147483648
    %v962 = vor.u32 1.1754944e-38, %v961
    %v963 = vsel %vm960, %v962, %v958
    %v964 = vmul.f32 %v748, %v963
    %v965 = vrcp.pop %v799
    %v966 = vmul.f32 %v799, %v965
    %v967 = vsub.f32 1.0, %v966
    %v968 = vmul.f32 %v965, %v967
    %v969 = vadd.f32 %v965, %v968
    %vm970 = vweird.f32 %v799
    %vm971 = vweird.f32 %v965
    %vm972 = vmor %vm970, %vm971
    %v973 = vsel %vm972, %v965, %v969
    %v974 = vand.u32 2147483647, %v799
    %vm975 = vcmp.eq.f32.partialorder %v974, 8.507059e+37
    %v976 = vand.u32 %v799, 2147483648
    %v977 = vor.u32 1.1754944e-38, %v976
    %v978 = vsel %vm975, %v977, %v973
    %v979 = vmul.f32 %v751, %v978
    %v980 = vrcp.pop %v802
    %v981 = vmul.f32 %v802, %v980
    %v982 = vsub.f32 1.0, %v981
    %v983 = vmul.f32 %v980, %v982
    %v984 = vadd.f32 %v980, %v983
    %vm985 = vweird.f32 %v802
    %vm986 = vweird.f32 %v980
    %vm987 = vmor %vm985, %vm986
    %v988 = vsel %vm987, %v980, %v984
    %v989 = vand.u32 2147483647, %v802
    %vm990 = vcmp.eq.f32.partialorder %v989, 8.507059e+37
    %v991 = vand.u32 %v802, 2147483648
    %v992 = vor.u32 1.1754944e-38, %v991
    %v993 = vsel %vm990, %v992, %v988
    %v994 = vmul.f32 %v754, %v993
    %v995 = vrcp.pop %v805
    %v996 = vmul.f32 %v805, %v995
    %v997 = vsub.f32 1.0, %v996
    %v998 = vmul.f32 %v995, %v997
    %v999 = vadd.f32 %v995, %v998
    %vm1000 = vweird.f32 %v805
    %vm1001 = vweird.f32 %v995
    %vm1002 = vmor %vm1000, %vm1001
    %v1003 = vsel %vm1002, %v995, %v999
    %v1004 = vand.u32 2147483647, %v805
    %vm1005 = vcmp.eq.f32.partialorder %v1004, 8.507059e+37
    %v1006 = vand.u32 %v805, 2147483648
    %v1007 = vor.u32 1.1754944e-38, %v1006
    %v1008 = vsel %vm1005, %v1007, %v1003
    %v1009 = vmul.f32 %v757, %v1008
    %v1010 = vrcp.pop %v808
    %v1011 = vmul.f32 %v808, %v1010
    %v1012 = vsub.f32 1.0, %v1011
    %v1013 = vmul.f32 %v1010, %v1012
    %v1014 = vadd.f32 %v1010, %v1013
    %vm1015 = vweird.f32 %v808
    %vm1016 = vweird.f32 %v1010
    %vm1017 = vmor %vm1015, %vm1016
    %v1018 = vsel %vm1017, %v1010, %v1014
    %v1019 = vand.u32 2147483647, %v808
    %vm1020 = vcmp.eq.f32.partialorder %v1019, 8.507059e+37
    %v1021 = vand.u32 %v808, 2147483648
    %v1022 = vor.u32 1.1754944e-38, %v1021
    %v1023 = vsel %vm1020, %v1022, %v1018
    %v1024 = vmul.f32 %v760, %v1023
    %v1025 = vrcp.pop %v811
    %v1026 = vmul.f32 %v811, %v1025
    %v1027 = vsub.f32 1.0, %v1026
    %v1028 = vmul.f32 %v1025, %v1027
    %v1029 = vadd.f32 %v1025, %v1028
    %vm1030 = vweird.f32 %v811
    %vm1031 = vweird.f32 %v1025
    %vm1032 = vmor %vm1030, %vm1031
    %v1033 = vsel %vm1032, %v1025, %v1029
    %v1034 = vand.u32 2147483647, %v811
    %vm1035 = vcmp.eq.f32.partialorder %v1034, 8.507059e+37
    %v1036 = vand.u32 %v811, 2147483648
    %v1037 = vor.u32 1.1754944e-38, %v1036
    %v1038 = vsel %vm1035, %v1037, %v1033
    %v1039 = vmul.f32 %v763, %v1038
    %v1040 = vrcp.pop %v814
    %v1041 = vmul.f32 %v814, %v1040
    %v1042 = vsub.f32 1.0, %v1041
    %v1043 = vmul.f32 %v1040, %v1042
    %v1044 = vadd.f32 %v1040, %v1043
    %vm1045 = vweird.f32 %v814
    %vm1046 = vweird.f32 %v1040
    %vm1047 = vmor %vm1045, %vm1046
    %v1048 = vsel %vm1047, %v1040, %v1044
    %v1049 = vand.u32 2147483647, %v814
    %vm1050 = vcmp.eq.f32.partialorder %v1049, 8.507059e+37
    %v1051 = vand.u32 %v814, 2147483648
    %v1052 = vor.u32 1.1754944e-38, %v1051
    %v1053 = vsel %vm1050, %v1052, %v1048
    %v1054 = vmul.f32 %v766, %v1053
    %v1055 = vlog2.pop %v829
    %v1056 = vmul.f32 %v1055, 0.6931472
    %v1057 = vlog2.pop %v844
    %v1058 = vmul.f32 %v1057, 0.6931472
    %v1059 = vlog2.pop %v859
    %v1060 = vmul.f32 %v1059, 0.6931472
    %v1061 = vlog2.pop %v874
    %v1062 = vmul.f32 %v1061, 0.6931472
    %v1063 = vlog2.pop %v889
    %v1064 = vmul.f32 %v1063, 0.6931472
    %v1065 = vlog2.pop %v904
    %v1066 = vmul.f32 %v1065, 0.6931472
    %v1067 = vlog2.pop %v919
    %v1068 = vmul.f32 %v1067, 0.6931472
    %v1069 = vlog2.pop %v934
    %v1070 = vmul.f32 %v1069, 0.6931472
    %v1071 = vlog2.pop %v949
    %v1072 = vmul.f32 %v1071, 0.6931472
    %v1073 = vlog2.pop %v964
    %v1074 = vmul.f32 %v1073, 0.6931472
    %v1075 = vlog2.pop %v979
    %v1076 = vmul.f32 %v1075, 0.6931472
    %v1077 = vlog2.pop %v994
    %v1078 = vmul.f32 %v1077, 0.6931472
    %v1079 = vlog2.pop %v1009
    %v1080 = vmul.f32 %v1079, 0.6931472
    %v1081 = vlog2.pop %v1024
    %v1082 = vmul.f32 %v1081, 0.6931472
    %v1083 = vlog2.pop %v1039
    %v1084 = vmul.f32 %v1083, 0.6931472
    %v1085 = vlog2.pop %v1054
    %v1086 = vmul.f32 %v1085, 0.6931472
    %v1087 = vsub.f32 0.0, %v1056
    %v1088 = vsub.f32 0.0, %v1058
    %v1089 = vsub.f32 0.0, %v1060
    %v1090 = vsub.f32 0.0, %v1062
    %v1091 = vsub.f32 0.0, %v1064
    %v1092 = vsub.f32 0.0, %v1066
    %v1093 = vsub.f32 0.0, %v1068
    %v1094 = vsub.f32 0.0, %v1070
    %v1095 = vsub.f32 0.0, %v1072
    %v1096 = vsub.f32 0.0, %v1074
    %v1097 = vsub.f32 0.0, %v1076
    %v1098 = vsub.f32 0.0, %v1078
    %v1099 = vsub.f32 0.0, %v1080
    %v1100 = vsub.f32 0.0, %v1082
    %v1101 = vsub.f32 0.0, %v1084
    %v1102 = vsub.f32 0.0, %v1086
    %vm1103 = vcmp.lt.s32.totalorder %v248, 8
    %vm1104 = vcmp.lt.s32.totalorder %v249, 8
    %vm1105 = vcmp.lt.s32.totalorder %v250, 8
    %vm1106 = vcmp.lt.s32.totalorder %v251, 8
    %vm1107 = vcmp.lt.s32.totalorder %v252, 8
    %vm1108 = vcmp.lt.s32.totalorder %v253, 8
    %vm1109 = vcmp.lt.s32.totalorder %v254, 8
    %vm1110 = vcmp.lt.s32.totalorder %v255, 8
    %vm1111 = vcmp.lt.s32.totalorder %v256, 8
    %vm1112 = vcmp.lt.s32.totalorder %v257, 8
    %vm1113 = vcmp.lt.s32.totalorder %v258, 8
    %vm1114 = vcmp.lt.s32.totalorder %v259, 8
    %vm1115 = vcmp.lt.s32.totalorder %v260, 8
    %vm1116 = vcmp.lt.s32.totalorder %v261, 8
    %vm1117 = vcmp.lt.s32.totalorder %v262, 8
    %vm1118 = vcmp.lt.s32.totalorder %v263, 8
    %v1119 = vsel %vm1103, %v1087, 0.0
    %v1120 = vsel %vm1104, %v1088, 0.0
    %v1121 = vsel %vm1105, %v1089, 0.0
    %v1122 = vsel %vm1106, %v1090, 0.0
    %v1123 = vsel %vm1107, %v1091, 0.0
    %v1124 = vsel %vm1108, %v1092, 0.0
    %v1125 = vsel %vm1109, %v1093, 0.0
    %v1126 = vsel %vm1110, %v1094, 0.0
    %v1127 = vsel %vm1111, %v1095, 0.0
    %v1128 = vsel %vm1112, %v1096, 0.0
    %v1129 = vsel %vm1113, %v1097, 0.0
    %v1130 = vsel %vm1114, %v1098, 0.0
    %v1131 = vsel %vm1115, %v1099, 0.0
    %v1132 = vsel %vm1116, %v1100, 0.0
    %v1133 = vsel %vm1117, %v1101, 0.0
    %v1134 = vsel %vm1118, %v1102, 0.0
    %v1135 = vadd.f32 %v1119, %v1120
    %v1136 = vadd.f32 %v1135, %v1121
    %v1137 = vadd.f32 %v1136, %v1122
    %v1138 = vadd.f32 %v1137, %v1123
    %v1139 = vadd.f32 %v1138, %v1124
    %v1140 = vadd.f32 %v1139, %v1125
    %v1141 = vadd.f32 %v1140, %v1126
    %v1142 = vadd.f32 %v1141, %v1127
    %v1143 = vadd.f32 %v1142, %v1128
    %v1144 = vadd.f32 %v1143, %v1129
    %v1145 = vadd.f32 %v1144, %v1130
    %v1146 = vadd.f32 %v1145, %v1131
    %v1147 = vadd.f32 %v1146, %v1132
    %v1148 = vadd.f32 %v1147, %v1133
    %v1149 = vadd.f32 %v1148, %v1134
    %v1150 = vrot.slane %v1149, 4
    %v1151 = vadd.f32 %v1149, %v1150
    %v1152 = vrot.slane %v1151, 2
    %v1153 = vadd.f32 %v1151, %v1152
    %v1154 = vrot.slane %v1153, 1
    %v1155 = vadd.f32 %v1153, %v1154
    %1156 = vst [vmem:[#allocation2] sm:$0xff] %v1155
    // Predicated region
    $region18: #{tpu_custom_call.1} parent=1 // pred_check
      _
    $region19: #{tpu_custom_call.1} parent=1 // pred_check_branch
      %1158 = sbr.rel (0) target = $region21
    $region20: #{tpu_custom_call.1} parent=1 // pred_region
      %1160 = vsyncadd [#allocation3], 0
      %s1162 = sshll.u32 [#allocation2], 4
      %s1163 = int_to_ptr.vmem [resolvable:$true] %s1162
      %s1164 = sshll.u32 %s4, 4
      %s1165 = int_to_ptr.hbm [resolvable:$true] %s1164
      %1167 = dma.vmem_to_hbm [thread:$0]  %s1163, 128, %s1165, [#allocation3]
    $region21: #{tpu_custom_call.1} parent=1 // pred_fallthru
      _
    // Predicated region
    $region22: #{tpu_custom_call.1} parent=1 // pred_check
      _
    $region23: #{tpu_custom_call.1} parent=1 // pred_check_branch
      %1169 = sbr.rel (0) target = $region25
    $region24: #{tpu_custom_call.1} parent=1 // pred_region
      %1171 = dma.done [#allocation3], 128
    $region25: #{tpu_custom_call.1} parent=1 // pred_fallthru
      _
    %1172 = vsyncpa [#allocation3], 1

</llo_original>
